<compile_context>
chip_gen: v7x
topology: tpu7x:2x2x1
jax: 0.10.0
libtpu: 0.0.40
codegen_flags: <defaults>
</compile_context>

<pallas_src>
import functools

import jax
import jax.numpy as jnp
import numpy as np
from jax.experimental import pallas as pl
from jax.experimental.pallas import tpu as pltpu


# 9 displacements = 3x3 effective kernel on a dilation-3 grid in the 7x7 footprint.
DIST_OFFSETS = tuple((3 * i, 3 * j) for i in range(3) for j in range(3))
ONE_OFFSET = ((0, 0),)
PAD = 3  # padding of the 7x7 DistConv


def fold_bn(gamma, beta, mean, var, eps=1e-5):
    scale = gamma / jnp.sqrt(var + eps)
    shift = beta - mean * scale
    return scale, shift


@functools.lru_cache(maxsize=None)
def _pltpu_roll_matches_jnp() -> bool:
    """Pin down pltpu.roll's lane-rotation direction once with a tiny probe kernel,
    so the displacement gather in the main kernel cannot silently flip."""

    def probe(x_ref, o_ref):
        o_ref[...] = pltpu.roll(x_ref[...], shift=1, axis=1)

    x = jax.lax.broadcasted_iota(jnp.int32, (8, 128), 1)
    y = pl.pallas_call(
        probe, out_shape=jax.ShapeDtypeStruct((8, 128), jnp.int32))(x)
    y = np.asarray(jax.block_until_ready(y))
    xn = np.asarray(x)
    if np.array_equal(y, np.roll(xn, 1, axis=1)):
        return True
    if np.array_equal(y, np.roll(xn, -1, axis=1)):
        return False
    raise RuntimeError("unexpected pltpu.roll semantics")


# ----------------------------------------------------------------------------
# Fused Pallas kernel: conv1+bn1+relu -> 1x1 downsample+bn -> conv2+bn2+add+relu
# ----------------------------------------------------------------------------
def make_fused_block_kernel(cin, planes, s, h, w, rel_offsets, roll_like_jnp):
    hw = h * w
    shw = s * hw
    ntap = len(rel_offsets)

    # Static lane-rotation amount per displacement tap so that rolled[p] = src[p+off].
    shifts = []
    for (rh, rw) in rel_offsets:
        off = rh * w + rw
        shifts.append(((-off) % shw) if roll_like_jnp else (off % shw))

    def kernel(x_ref, w1_ref, b1_ref, wd_ref, bd_ref, w2_ref, b2_ref,
               o_ref, xcol1_ref, xcol2_ref):
        # Per-tap validity masks on the flattened (s, h, w) lane axis.  They zero
        # taps that fall outside the 2-D image, which replaces explicit spatial
        # zero-padding (no jnp.pad / halo DMA anywhere).  Shared by conv1 & conv2.
        lane = jax.lax.broadcasted_iota(jnp.int32, (1, shw), 1)
        hq = (lane % hw) // w
        wq = lane % w
        masks = []
        for (rh, rw) in rel_offsets:
            masks.append((hq + rh >= 0) & (hq + rh < h) &
                         (wq + rw >= 0) & (wq + rw < w))

        def build_xcol(src, xcol_ref, c):
            # im2col in VMEM: 9 lane-rotated + masked copies of `src` stacked along
            # the contraction axis -> a single K = 9*c matmul per conv.
            for ti in range(ntap):
                if shifts[ti] == 0:
                    shifted = src
                else:
                    shifted = pltpu.roll(src, shift=shifts[ti], axis=1)
                xcol_ref[ti * c:(ti + 1) * c, :] = jnp.where(masks[ti], shifted, 0.0)

        x = x_ref[0]                                    # (cin, s*h*w), lane-dense

        # conv1 (single K = 9*cin MXU matmul) + folded bn1 + relu
        build_xcol(x, xcol1_ref, cin)
        y1 = jnp.dot(w1_ref[...], xcol1_ref[...],
                     preferred_element_type=jnp.float32)
        y1 = jnp.maximum(y1 + b1_ref[...], 0.0)         # (planes, s*h*w)

        # downsample branch: 1x1 conv + folded bn, straight from the resident x
        res = jnp.dot(wd_ref[...], x,
                      preferred_element_type=jnp.float32) + bd_ref[...]

        # conv2 (single K = 9*planes matmul) + folded bn2 + residual + relu
        build_xcol(y1, xcol2_ref, planes)
        y2 = jnp.dot(w2_ref[...], xcol2_ref[...],
                     preferred_element_type=jnp.float32) + b2_ref[...]
        o_ref[0] = jnp.maximum(y2 + res, 0.0).astype(o_ref.dtype)

    return kernel


def dist_basic_block_forward(x_ncshw, params):
    """x_ncshw: (N, C_in, S, H, W) float32 -> (N, planes, S, H, W)."""
    n, cin, s, h, w = x_ncshw.shape
    ntap = params["w1"].shape[0]
    planes = params["w1"].shape[-1]
    shw = s * h * w
    rel_offsets = tuple((dh - PAD, dw - PAD) for (dh, dw) in DIST_OFFSETS)
    assert ntap == len(rel_offsets)

    # Fold BatchNorm3d (inference form) into the conv weights + a per-channel bias.
    s1, b1 = fold_bn(*params["bn1"])
    s2, b2 = fold_bn(*params["bn2"])
    sd, bd = fold_bn(*params["bnd"])

    # Kernel-facing weights: (Cout, K) so each matmul output is (Cout, S*H*W).
    w1t = (s1[:, None] * params["w1"].reshape(ntap * cin, planes).T).astype(jnp.float32)
    w2t = (s2[:, None] * params["w2"].reshape(ntap * planes, planes).T).astype(jnp.float32)
    wdt = (sd[:, None] * params["wd"].reshape(cin, planes).T).astype(jnp.float32)
    b1c = b1[:, None].astype(jnp.float32)
    b2c = b2[:, None].astype(jnp.float32)
    bdc = bd[:, None].astype(jnp.float32)

    x_flat = x_ncshw.reshape(n, cin, shw)       # free reshape, no HBM transpose/pad

    kernel = make_fused_block_kernel(cin, planes, s, h, w, rel_offsets,
                                     _pltpu_roll_matches_jnp())

    out = pl.pallas_call(
        kernel,
        out_shape=jax.ShapeDtypeStruct((n, planes, shw), x_ncshw.dtype),
        grid=(n,),                               # >=2 even steps -> both v7x TCs busy
        in_specs=[
            pl.BlockSpec((1, cin, shw), lambda i: (i, 0, 0)),
            pl.BlockSpec((planes, ntap * cin), lambda i: (0, 0)),
            pl.BlockSpec((planes, 1), lambda i: (0, 0)),
            pl.BlockSpec((planes, cin), lambda i: (0, 0)),
            pl.BlockSpec((planes, 1), lambda i: (0, 0)),
            pl.BlockSpec((planes, ntap * planes), lambda i: (0, 0)),
            pl.BlockSpec((planes, 1), lambda i: (0, 0)),
        ],
        out_specs=pl.BlockSpec((1, planes, shw), lambda i: (i, 0, 0)),
        scratch_shapes=[
            pltpu.VMEM((ntap * cin, shw), jnp.float32),     # im2col for conv1
            pltpu.VMEM((ntap * planes, shw), jnp.float32),  # im2col for conv2
        ],
        compiler_params=pltpu.CompilerParams(
            dimension_semantics=("parallel",),
            vmem_limit_bytes=32 * 1024 * 1024,   # explicit budget (v7x: 64 MiB phys)
        ),
    )(x_flat, w1t, b1c, wdt, bdc, w2t, b2c)

    return out.reshape(n, planes, s, h, w)       # free reshape back to NCSHW


# ----------------------------------------------------------------------------
# Pure-JAX reference (for sanity checking the fused kernel)
# ----------------------------------------------------------------------------
def ref_conv_bn(x_nhwc, w_taps, offsets, K, scale, shift, residual=None, relu=False):
    cin, cout = w_taps.shape[1], w_taps.shape[2]
    w_full = jnp.zeros((K, K, cin, cout), jnp.float32)
    for t, (dh, dw) in enumerate(offsets):
        w_full = w_full.at[dh, dw].set(w_taps[t])
    y = jax.lax.conv_general_dilated(
        x_nhwc, w_full, window_strides=(1, 1),
        padding=[(K // 2, K // 2), (K // 2, K // 2)],
        dimension_numbers=("NHWC", "HWIO", "NHWC"))
    y = y * scale.reshape(1, 1, 1, -1) + shift.reshape(1, 1, 1, -1)
    if residual is not None:
        y = y + residual
    if relu:
        y = jnp.maximum(y, 0.0)
    return y


def ref_forward(x_ncshw, params):
    N, Cin, S, H, W = x_ncshw.shape
    planes = params["w1"].shape[-1]
    x = jnp.transpose(x_ncshw, (0, 2, 3, 4, 1)).reshape(N * S, H, W, Cin)
    s1, b1 = fold_bn(*params["bn1"])
    s2, b2 = fold_bn(*params["bn2"])
    sd, bd = fold_bn(*params["bnd"])
    out1 = ref_conv_bn(x, params["w1"], DIST_OFFSETS, 7, s1, b1, relu=True)
    res = ref_conv_bn(x, params["wd"], ONE_OFFSET, 1, sd, bd)
    out2 = ref_conv_bn(out1, params["w2"], DIST_OFFSETS, 7, s2, b2,
                       residual=res, relu=True)
    return jnp.transpose(out2.reshape(N, S, H, W, planes), (0, 4, 1, 2, 3))


# ----------------------------------------------------------------------------
# Deterministic parameter initialization
# ----------------------------------------------------------------------------
def init_params(key, in_planes, planes):
    ks = jax.random.split(key, 16)

    def eff_weight(k, cin, cout):
        w = jax.random.normal(k, (3, 3, cin, cout), jnp.float32)
        return (w / (3.0 * np.sqrt(cin))).reshape(9, cin, cout)

    def bn(kg, kb, km, kv, c):
        gamma = 0.5 + jax.random.uniform(kg, (c,), jnp.float32)
        beta = 0.1 * jax.random.normal(kb, (c,), jnp.float32)
        mean = 0.1 * jax.random.normal(km, (c,), jnp.float32)
        var = 0.5 + jax.random.uniform(kv, (c,), jnp.float32)
        return gamma, beta, mean, var

    params = {
        "w1": eff_weight(ks[0], in_planes, planes),
        "w2": eff_weight(ks[1], planes, planes),
        "wd": (jax.random.normal(ks[2], (1, in_planes, planes), jnp.float32)
               / np.sqrt(in_planes)),
        "bn1": bn(ks[3], ks[4], ks[5], ks[6], planes),
        "bn2": bn(ks[7], ks[8], ks[9], ks[10], planes),
        "bnd": bn(ks[11], ks[12], ks[13], ks[14], planes),
    }
    return params


if __name__ == "__main__":
    N, in_planes, planes, S, H, W = 2, 4, 8, 4, 16, 16  # stride=1 (module default)

    key = jax.random.PRNGKey(0)
    k_x, k_p = jax.random.split(key)
    x = jax.random.normal(k_x, (N, in_planes, S, H, W), jnp.float32)
    params = init_params(k_p, in_planes, planes)

    _ = _pltpu_roll_matches_jnp()  # warm the tiny roll-direction probe once

    fwd = jax.jit(functools.partial(dist_basic_block_forward, params=params))
    out = fwd(x)
    out = jax.block_until_ready(out)

    ref = jax.block_until_ready(ref_forward(x, params))
    assert out.shape == (N, planes, S, H, W), out.shape
    np.testing.assert_allclose(np.asarray(out), np.asarray(ref),
                               rtol=1e-2, atol=1e-2)

    print("KERNEL_OK")
</pallas_src>

<mosaic_0001>
module attributes {stable_mosaic.version = 11 : i64} {
  func.func @probe(%arg0: memref<8x128xi32, #tpu.memory_space<vmem>>, %arg1: memref<8x128xi32, #tpu.memory_space<vmem>>) attributes {dimension_semantics = [], scalar_prefetch = 0 : i64, scratch_operands = 0 : i64, tpu.core_type = #tpu.core_type<tc>} {
    %c0 = arith.constant 0 : index
    %c0_0 = arith.constant 0 : index
    %0 = vector.load %arg0[%c0, %c0_0] : memref<8x128xi32, #tpu.memory_space<vmem>>, vector<8x128xi32>
    %c1_i32 = arith.constant 1 : i32
    %1 = tpu.dynamic_rotate %0 by %c1_i32 dim 1 : vector<8x128xi32>, i32 -> vector<8x128xi32>
    %c0_1 = arith.constant 0 : index
    %c0_2 = arith.constant 0 : index
    %2 = vector.load %arg1[%c0_1, %c0_2] : memref<8x128xi32, #tpu.memory_space<vmem>>, vector<8x128xi32>
    tpu.vector_store %arg1[%c0_1, %c0_2], %1 {strides = array<i32>} : memref<8x128xi32, #tpu.memory_space<vmem>>, vector<8x128xi32>,
    return
  }
}

</mosaic_0001>

<llo_original>
// kernel: tpu_custom_call.1
$region0: #{tpu_custom_call.1}
  #allocation0 [shape = 'u32[]', space=smem, size = 0x4, offset = 0x4, fixed_abs, tag = 'smem constant byte address 0x4 - core index']
  #allocation1 [shape = 'u32[144,128]{1,0:T(1,128)}', space=vmem, size = 0x12000, scoped, tag = 'internal scratch']
  %s0 = inlined_call_operand.hbm [shape: s32[8,128], index: 0, kind: input, shape index: {}]
  %s1 = inlined_call_operand.hbm [shape: s32[8,128], index: 1, kind: output, shape index: {}]
  %s2 = sld [smem:[#allocation0]]
  $region18: #{tpu_custom_call.1} parent=0
    _
  %s4 = ssub.s32 1, %s2
  %s5 = scalar_select 0, %s4, %s2
  $region1: #{tpu_custom_call.1} parent=0
    #allocation2 [shape = 'u8[4096]{0}', space=vmem, size = 0x1000, scoped, tag = 'input window, operand 0, single buffered']
    #allocation3 [shape = 's32[1]{0}', space=sflag, size = 0x4, scoped, tag = 'scoped memory for tpu_custom_call.1']
    #allocation4 [shape = 's32[1]{0}', space=sflag, size = 0x4, scoped, tag = 'scoped memory for tpu_custom_call.1']
    #allocation5 [shape = 'u8[4096]{0}', space=vmem, size = 0x1000, scoped, tag = 'output window, operand 0, single buffered']
    %6 = vsyncpa [#allocation3], 0
    %7 = vsyncpa [#allocation4], 0
    // Predicated region
    $region2: #{tpu_custom_call.1} parent=1 // pred_check
      _
    $region3: #{tpu_custom_call.1} parent=1 // pred_check_branch
      %9 = sbr.rel (0) target = $region5
    $region4: #{tpu_custom_call.1} parent=1 // pred_region
      %s11 = ssub.s32 128, 128
      %12 = vsyncadd [#allocation3], %s11
      %s14 = sshll.u32 [#allocation2], 4
      %s15 = int_to_ptr.vmem [resolvable:$true] %s14
      %17 = dma.hbm_to_vmem [thread:$0]  %s0, 128, %s15, [#allocation3]
    $region5: #{tpu_custom_call.1} parent=1 // pred_fallthru
      _
    // Predicated region
    $region6: #{tpu_custom_call.1} parent=1 // pred_check
      _
    $region7: #{tpu_custom_call.1} parent=1 // pred_check_branch
      %19 = sbr.rel (0) target = $region9
    $region8: #{tpu_custom_call.1} parent=1 // pred_region
      %20 = dma.done [#allocation3], 128
    $region9: #{tpu_custom_call.1} parent=1 // pred_fallthru
      _
    %v21 = vld [vmem:[#allocation2] sm:$0xff]
    %22 = vrot.lane.b32.xlu0 %v21, 1
    %v23 = vpop.permute.xlu0 %22
    %24 = vst [vmem:[#allocation5] sm:$0xff] %v23
    // Predicated region
    $region10: #{tpu_custom_call.1} parent=1 // pred_check
      _
    $region11: #{tpu_custom_call.1} parent=1 // pred_check_branch
      %26 = sbr.rel (0) target = $region13
    $region12: #{tpu_custom_call.1} parent=1 // pred_region
      %s28 = ssub.s32 128, 128
      %29 = vsyncadd [#allocation4], %s28
      %s31 = sshll.u32 [#allocation5], 4
      %s32 = int_to_ptr.vmem [resolvable:$true] %s31
      %34 = dma.vmem_to_hbm [thread:$0]  %s32, 128, %s1, [#allocation4]
    $region13: #{tpu_custom_call.1} parent=1 // pred_fallthru
      _
    // Predicated region
    $region14: #{tpu_custom_call.1} parent=1 // pred_check
      _
    $region15: #{tpu_custom_call.1} parent=1 // pred_check_branch
      %36 = sbr.rel (0) target = $region17
    $region16: #{tpu_custom_call.1} parent=1 // pred_region
      %37 = dma.done [#allocation4], 128
    $region17: #{tpu_custom_call.1} parent=1 // pred_fallthru
      _
    %38 = vsyncpa [#allocation3], 1
    %39 = vsyncpa [#allocation4], 1

</llo_original>
